<compile_context>
chip_gen: v6e
topology: v6e:2x2x1
jax: 0.10.0
libtpu: 0.0.40
codegen_flags: <defaults>
</compile_context>

<pallas_src>
import functools
import math

import jax
import jax.numpy as jnp
from jax.experimental import pallas as pl
from jax.experimental.pallas import tpu as pltpu

_LOG_2PI_HALF = 0.5 * math.log(2.0 * math.pi)
_EPS = 1e-5


def _round_up(x, m):
    return ((x + m - 1) // m) * m


def _choose_batch_tile(batch):
    """Batch tile: multiple of 16 (bf16 sublane packing), >=2 grid steps when
    the batch allows it (keeps both v7x TensorCores busy with the "parallel"
    grid axis), capped at 1024 rows so the double-buffered footprint stays far
    below the 32 MiB scoped-VMEM default on every generation."""
    rounded = _round_up(batch, 16)
    if rounded <= 32:
        return rounded, rounded                      # single tiny tile
    tile = min(1024, _round_up((rounded + 1) // 2, 16))
    return tile, _round_up(batch, tile)


def _default_affine_dtype():
    """bf16 LayerNorm-affine / ReLU only where the VPU has native bf16
    (v6e / v7x); f32 everywhere else (v5e has no bf16 VALU)."""
    try:
        kind = jax.devices()[0].device_kind.lower()
    except Exception:
        return jnp.float32
    if "v6" in kind or "v7" in kind or "7x" in kind:
        return jnp.bfloat16
    return jnp.float32


def _actor_value_kernel(state_ref, aux_ref, w1_ref, c1_ref, w2_ref, c2_ref,
                        whead_ref, bhead_ref, out_ref, *,
                        action_size, affine_dtype):
    A = action_size
    mm_dtype = w1_ref.dtype          # bf16 (or f32) matmul operand dtype
    cdt = affine_dtype               # LN-affine / ReLU compute dtype

    def layer(x, w_ref, c_ref):
        # Linear (f32 MXU accumulation) + LayerNorm (two-pass var) + ReLU.
        h = jnp.dot(x, w_ref[...], preferred_element_type=jnp.float32)
        h = h + c_ref[0:1, :]                       # bias row (f32)
        inv_f = 1.0 / h.shape[-1]
        m = jnp.sum(h, axis=-1, keepdims=True) * inv_f
        d = h - m
        v = jnp.sum(d * d, axis=-1, keepdims=True) * inv_f
        hn = (d * jax.lax.rsqrt(v + _EPS)).astype(cdt)
        hn = hn * c_ref[1:2, :].astype(cdt) + c_ref[2:3, :].astype(cdt)
        return jnp.maximum(hn, 0.0).astype(mm_dtype)

    # BatchNorm1d is already folded into (w1, b1) by the wrapper.
    x = state_ref[...].astype(mm_dtype)
    h = layer(x, w1_ref, c1_ref)                    # fc1 -> LN -> ReLU
    feats = layer(h, w2_ref, c2_ref)                # fc2 -> LN -> ReLU

    # Fused (mu | value) head: cols [0:A] = fc_mu, col 2A = vfn, rest 0.
    head = jnp.dot(feats, whead_ref[...],
                   preferred_element_type=jnp.float32) + bhead_ref[...]

    # Packed output slab (single 128-lane segment):
    #   lanes 0:A  -> actions = tanh(mu) + sigma * noise
    #   lanes A:2A -> log_prob = -0.5*noise^2 - logstd - 0.5*log(2*pi)
    #   lane  2A   -> value
    # aux = [sigma*noise | log_prob] was precomputed in the wrapper; head's
    # columns A:2A are exactly zero, so tanh(head[:, :2A]) + aux yields
    # actions at 0:A and log_prob at A:2A with a single add.
    out_ref[...] = head                              # puts value at lane 2A
    out_ref[:, 0:2 * A] = jnp.tanh(head[:, 0:2 * A]) + aux_ref[...]


def init_params(key, state_size, action_size, fc_units=(256, 256)):
    """Deterministic parameter init mirroring the module's reset_parameters()."""
    f1, f2 = fc_units
    ks = jax.random.split(key, 8)

    def unif(k, shape, lim):
        return jax.random.uniform(k, shape, jnp.float32, -lim, lim)

    p = {}
    # BatchNorm1d: weight filled with 1.0, bias defaults to 0.
    p["bn_w"] = jnp.ones((1, state_size), jnp.float32)
    p["bn_b"] = jnp.zeros((1, state_size), jnp.float32)
    # fc1 (weight stored transposed: (in, out)); hidden_init uses out_features.
    p["w1"] = unif(ks[0], (state_size, f1), 1.0 / math.sqrt(f1))
    p["b1"] = unif(ks[1], (1, f1), 1.0 / math.sqrt(state_size))
    p["ln1_w"] = jnp.ones((1, f1), jnp.float32)
    p["ln1_b"] = jnp.zeros((1, f1), jnp.float32)
    # fc2
    p["w2"] = unif(ks[2], (f1, f2), 1.0 / math.sqrt(f2))
    p["b2"] = unif(ks[3], (1, f2), 1.0 / math.sqrt(f1))
    p["ln2_w"] = jnp.ones((1, f2), jnp.float32)
    p["ln2_b"] = jnp.zeros((1, f2), jnp.float32)
    # fc_mu
    p["w_mu"] = unif(ks[4], (f2, action_size), 0.003)
    p["b_mu"] = unif(ks[5], (1, action_size), 1.0 / math.sqrt(f2))
    # logstd (frozen at zeros)
    p["logstd"] = jnp.zeros((1, action_size), jnp.float32)
    # vfn
    p["w_v"] = unif(ks[6], (f2, 1), 0.003)
    p["b_v"] = unif(ks[7], (1, 1), 1.0 / math.sqrt(f2))
    return p


def fc_gaussian_actor_value_forward(state, noise, params, *,
                                    matmul_dtype=jnp.bfloat16,
                                    affine_dtype=None):
    """Returns (actions, log_prob, value) — forward(state, eval=False).

    `noise` is the standard-normal draw pd.sample() would make (supplied
    deterministically so results are reproducible / checkable)."""
    B, S = state.shape
    A = params["w_mu"].shape[1]
    f1 = params["w1"].shape[1]
    f2 = params["w2"].shape[1]
    PAD = _round_up(2 * A + 1, 128)         # lane-dense head / output width
    md = matmul_dtype
    if affine_dtype is None:
        affine_dtype = _default_affine_dtype()

    # --- BatchNorm1d training-mode batch statistics (tiny (B,S) reduction),
    #     folded into fc1 so every batch tile is independent ("parallel").
    xf = state.astype(jnp.float32)
    mean = jnp.mean(xf, axis=0, keepdims=True)
    var = jnp.mean(jnp.square(xf - mean), axis=0, keepdims=True)
    inv = jax.lax.rsqrt(var + _EPS)
    bn_scale = params["bn_w"] * inv                       # (1, S)
    bn_shift = params["bn_b"] - mean * bn_scale           # (1, S)
    w1 = (bn_scale.reshape(S, 1) * params["w1"]).astype(md)      # (S, f1)
    b1 = bn_shift @ params["w1"] + params["b1"]                  # (1, f1)
    w2 = params["w2"].astype(md)

    # --- fused (mu | value) head, zero-padded to 128 lanes; value at col 2A.
    w_head = (jnp.zeros((f2, PAD), jnp.float32)
              .at[:, :A].set(params["w_mu"])
              .at[:, 2 * A:2 * A + 1].set(params["w_v"])).astype(md)
    b_head = (jnp.zeros((1, PAD), jnp.float32)
              .at[:, :A].set(params["b_mu"])
              .at[:, 2 * A:2 * A + 1].set(params["b_v"]))

    # --- packed per-layer constant rows: [bias; ln_weight; ln_bias]  (3, f)
    c1 = jnp.concatenate([b1, params["ln1_w"], params["ln1_b"]], axis=0)
    c2 = jnp.concatenate([params["b2"], params["ln2_w"], params["ln2_b"]],
                         axis=0)

    # --- aux = [sigma*noise | log_prob] at natural 2A width (64 B/row).
    #     log_prob uses actions - mu == sigma * noise, so it only depends on
    #     the noise and the (frozen) logstd.
    nz = noise.astype(jnp.float32)
    sigma = jnp.exp(params["logstd"])
    logp = -0.5 * jnp.square(nz) - params["logstd"] - _LOG_2PI_HALF
    aux = jnp.concatenate([nz * sigma, logp], axis=1)     # (B, 2A)

    # --- batch tiling ---
    tile_b, Bp = _choose_batch_tile(B)
    if Bp != B:
        state_p = jnp.zeros((Bp, S), md).at[:B].set(state.astype(md))
        aux_p = jnp.zeros((Bp, 2 * A), jnp.float32).at[:B].set(aux)
    else:
        state_p = state
        aux_p = aux

    kernel = functools.partial(_actor_value_kernel,
                               action_size=A, affine_dtype=affine_dtype)

    row = lambda i: (i, 0)
    const = lambda i: (0, 0)
    in_specs = [
        pl.BlockSpec((tile_b, S), row),          # state (BN folded away)
        pl.BlockSpec((tile_b, 2 * A), row),      # aux = [sigma*noise | logp]
        pl.BlockSpec((S, f1), const),            # w1 (BN-folded, bf16)
        pl.BlockSpec((3, f1), const),            # [b1; ln1_w; ln1_b]
        pl.BlockSpec((f1, f2), const),           # w2
        pl.BlockSpec((3, f2), const),            # [b2; ln2_w; ln2_b]
        pl.BlockSpec((f2, PAD), const),          # fused head weight
        pl.BlockSpec((1, PAD), const),           # fused head bias (f32)
    ]
    out_specs = pl.BlockSpec((tile_b, PAD), row)
    out_shape = jax.ShapeDtypeStruct((Bp, PAD), jnp.float32)

    slab = pl.pallas_call(
        kernel,
        out_shape=out_shape,
        grid=(Bp // tile_b,),
        in_specs=in_specs,
        out_specs=out_specs,
        compiler_params=pltpu.CompilerParams(
            dimension_semantics=("parallel",)),
    )(state_p, aux_p, w1, c1, w2, c2, w_head, b_head)

    actions = slab[:B, 0:A]
    log_prob = slab[:B, A:2 * A]
    value = slab[:B, 2 * A:2 * A + 1]
    return actions, log_prob, value


def _reference_forward(state, noise, params):
    """Pure-JAX f32 reference of the PyTorch forward(state, eval=False)."""
    x = state.astype(jnp.float32)
    mean = jnp.mean(x, axis=0, keepdims=True)
    var = jnp.mean(jnp.square(x - mean), axis=0, keepdims=True)
    x = (x - mean) * jax.lax.rsqrt(var + _EPS) * params["bn_w"] + params["bn_b"]

    def ln(h, w, b):
        m = jnp.mean(h, axis=-1, keepdims=True)
        v = jnp.mean(jnp.square(h - m), axis=-1, keepdims=True)
        return (h - m) * jax.lax.rsqrt(v + _EPS) * w + b

    h = jnp.maximum(ln(x @ params["w1"] + params["b1"],
                       params["ln1_w"], params["ln1_b"]), 0.0)
    feats = jnp.maximum(ln(h @ params["w2"] + params["b2"],
                           params["ln2_w"], params["ln2_b"]), 0.0)
    mu = jnp.tanh(feats @ params["w_mu"] + params["b_mu"])
    sigma = jnp.exp(params["logstd"])
    actions = mu + sigma * noise
    logp = (-jnp.square(actions - mu) / (2.0 * jnp.square(sigma))
            - params["logstd"] - _LOG_2PI_HALF)
    value = feats @ params["w_v"] + params["b_v"]
    return actions, logp, value


if __name__ == "__main__":
    # Small shapes consistent with the module: batch=8, state_size=16,
    # action_size=8, default hidden widths (256, 256).
    batch, state_size, action_size = 8, 16, 8
    fc_units = (256, 256)

    key = jax.random.PRNGKey(0)
    k_params, k_state, k_noise = jax.random.split(key, 3)

    params = init_params(k_params, state_size, action_size, fc_units)
    state = jax.random.normal(k_state, (batch, state_size), jnp.float32)
    # pd.sample() draws standard normal noise; we supply it deterministically.
    noise = jax.random.normal(k_noise, (batch, action_size), jnp.float32)

    fwd = jax.jit(fc_gaussian_actor_value_forward)
    actions, log_prob, value = fwd(state, noise, params)
    jax.block_until_ready((actions, log_prob, value))

    assert actions.shape == (batch, action_size)
    assert log_prob.shape == (batch, action_size)
    assert value.shape == (batch, 1)

    # Loose sanity check vs. pure-JAX f32 reference (kernel matmuls are bf16).
    ref_a, ref_lp, ref_v = _reference_forward(state, noise, params)
    assert bool(jnp.allclose(actions, ref_a, rtol=1e-1, atol=5e-2))
    assert bool(jnp.allclose(log_prob, ref_lp, rtol=1e-1, atol=5e-2))
    assert bool(jnp.allclose(value, ref_v, rtol=1e-1, atol=5e-2))
    print("KERNEL_OK")
</pallas_src>

<mosaic_0001>
module attributes {stable_mosaic.version = 11 : i64} {
  func.func @_actor_value_kernel(%arg0: i32, %arg1: memref<16x16xbf16, #tpu.memory_space<vmem>>, %arg2: memref<16x16xf32, #tpu.memory_space<vmem>>, %arg3: memref<16x256xbf16, #tpu.memory_space<vmem>>, %arg4: memref<3x256xf32, #tpu.memory_space<vmem>>, %arg5: memref<256x256xbf16, #tpu.memory_space<vmem>>, %arg6: memref<3x256xf32, #tpu.memory_space<vmem>>, %arg7: memref<256x128xbf16, #tpu.memory_space<vmem>>, %arg8: memref<1x128xf32, #tpu.memory_space<vmem>>, %arg9: memref<16x128xf32, #tpu.memory_space<vmem>>) attributes {dimension_semantics = [#tpu.dimension_semantics<parallel>], iteration_bounds = array<i64: 1>, scalar_prefetch = 0 : i64, scratch_operands = 0 : i64, tpu.core_type = #tpu.core_type<tc>, window_params = [{transform_indices = @transform_0, window_bounds = array<i64: 16, 16>}, {transform_indices = @transform_1, window_bounds = array<i64: 16, 16>}, {pipeline_mode = #tpu.pipeline_mode<synchronous>, transform_indices = @transform_2, window_bounds = array<i64: 16, 256>}, {pipeline_mode = #tpu.pipeline_mode<synchronous>, transform_indices = @transform_3, window_bounds = array<i64: 3, 256>}, {pipeline_mode = #tpu.pipeline_mode<synchronous>, transform_indices = @transform_4, window_bounds = array<i64: 256, 256>}, {pipeline_mode = #tpu.pipeline_mode<synchronous>, transform_indices = @transform_5, window_bounds = array<i64: 3, 256>}, {pipeline_mode = #tpu.pipeline_mode<synchronous>, transform_indices = @transform_6, window_bounds = array<i64: 256, 128>}, {pipeline_mode = #tpu.pipeline_mode<synchronous>, transform_indices = @transform_7, window_bounds = array<i64: 1, 128>}, {transform_indices = @transform_8, window_bounds = array<i64: 16, 128>}]} {
    %c0 = arith.constant 0 : index
    %c0_0 = arith.constant 0 : index
    %0 = vector.load %arg1[%c0, %c0_0] : memref<16x16xbf16, #tpu.memory_space<vmem>>, vector<16x16xbf16>
    %c0_1 = arith.constant 0 : index
    %c0_2 = arith.constant 0 : index
    %1 = vector.load %arg3[%c0_1, %c0_2] : memref<16x256xbf16, #tpu.memory_space<vmem>>, vector<16x256xbf16>
    %cst = arith.constant dense<0.000000e+00> : vector<16x256xf32>
    %2 = tpu.matmul %0, %1, %cst {dimension_numbers = #tpu.dot_dimension_numbers<[1], [0], [0], [1], [0, 0, 1, 1], [], []>} : vector<16x16xbf16>, vector<16x256xbf16>, vector<16x256xf32> -> vector<16x256xf32>
    %c0_3 = arith.constant 0 : index
    %c0_4 = arith.constant 0 : index
    %3 = vector.load %arg4[%c0_3, %c0_4] : memref<3x256xf32, #tpu.memory_space<vmem>>, vector<1x256xf32>
    %4 = vector.broadcast %3 : vector<1x256xf32> to vector<16x256xf32>
    %5 = arith.addf %2, %4 : vector<16x256xf32>
    %cst_5 = arith.constant dense<0.000000e+00> : vector<16xf32>
    %6 = vector.multi_reduction <add>, %5, %cst_5 [1] : vector<16x256xf32> to vector<16xf32>
    %7 = vector.shape_cast %6 : vector<16xf32> to vector<16x1xf32>
    %cst_6 = arith.constant 3.906250e-03 : f32
    %8 = vector.broadcast %cst_6 : f32 to vector<16x1xf32>
    %9 = arith.mulf %7, %8 : vector<16x1xf32>
    %10 = vector.broadcast %9 : vector<16x1xf32> to vector<16x256xf32>
    %11 = arith.subf %5, %10 : vector<16x256xf32>
    %12 = arith.mulf %11, %11 : vector<16x256xf32>
    %cst_7 = arith.constant dense<0.000000e+00> : vector<16xf32>
    %13 = vector.multi_reduction <add>, %12, %cst_7 [1] : vector<16x256xf32> to vector<16xf32>
    %14 = vector.shape_cast %13 : vector<16xf32> to vector<16x1xf32>
    %cst_8 = arith.constant 3.906250e-03 : f32
    %15 = vector.broadcast %cst_8 : f32 to vector<16x1xf32>
    %16 = arith.mulf %14, %15 : vector<16x1xf32>
    %cst_9 = arith.constant 9.99999974E-6 : f32
    %17 = vector.broadcast %cst_9 : f32 to vector<16x1xf32>
    %18 = arith.addf %16, %17 : vector<16x1xf32>
    %19 = math.rsqrt %18 : vector<16x1xf32>
    %20 = vector.broadcast %19 : vector<16x1xf32> to vector<16x256xf32>
    %21 = arith.mulf %11, %20 : vector<16x256xf32>
    %c1 = arith.constant 1 : index
    %c0_10 = arith.constant 0 : index
    %22 = vector.load %arg4[%c1, %c0_10] : memref<3x256xf32, #tpu.memory_space<vmem>>, vector<1x256xf32>
    %23 = vector.broadcast %22 : vector<1x256xf32> to vector<16x256xf32>
    %24 = arith.mulf %21, %23 : vector<16x256xf32>
    %c2 = arith.constant 2 : index
    %c0_11 = arith.constant 0 : index
    %25 = vector.load %arg4[%c2, %c0_11] : memref<3x256xf32, #tpu.memory_space<vmem>>, vector<1x256xf32>
    %26 = vector.broadcast %25 : vector<1x256xf32> to vector<16x256xf32>
    %27 = arith.addf %24, %26 : vector<16x256xf32>
    %cst_12 = arith.constant 0.000000e+00 : f32
    %28 = vector.broadcast %cst_12 : f32 to vector<16x256xf32>
    %29 = arith.maximumf %27, %28 : vector<16x256xf32>
    %30 = arith.truncf %29 : vector<16x256xf32> to vector<16x256xbf16>
    %c0_13 = arith.constant 0 : index
    %c0_14 = arith.constant 0 : index
    %31 = vector.load %arg5[%c0_13, %c0_14] : memref<256x256xbf16, #tpu.memory_space<vmem>>, vector<256x256xbf16>
    %cst_15 = arith.constant dense<0.000000e+00> : vector<16x256xf32>
    %32 = tpu.matmul %30, %31, %cst_15 {dimension_numbers = #tpu.dot_dimension_numbers<[1], [0], [0], [1], [0, 0, 1, 1], [], []>} : vector<16x256xbf16>, vector<256x256xbf16>, vector<16x256xf32> -> vector<16x256xf32>
    %c0_16 = arith.constant 0 : index
    %c0_17 = arith.constant 0 : index
    %33 = vector.load %arg6[%c0_16, %c0_17] : memref<3x256xf32, #tpu.memory_space<vmem>>, vector<1x256xf32>
    %34 = vector.broadcast %33 : vector<1x256xf32> to vector<16x256xf32>
    %35 = arith.addf %32, %34 : vector<16x256xf32>
    %cst_18 = arith.constant dense<0.000000e+00> : vector<16xf32>
    %36 = vector.multi_reduction <add>, %35, %cst_18 [1] : vector<16x256xf32> to vector<16xf32>
    %37 = vector.shape_cast %36 : vector<16xf32> to vector<16x1xf32>
    %cst_19 = arith.constant 3.906250e-03 : f32
    %38 = vector.broadcast %cst_19 : f32 to vector<16x1xf32>
    %39 = arith.mulf %37, %38 : vector<16x1xf32>
    %40 = vector.broadcast %39 : vector<16x1xf32> to vector<16x256xf32>
    %41 = arith.subf %35, %40 : vector<16x256xf32>
    %42 = arith.mulf %41, %41 : vector<16x256xf32>
    %cst_20 = arith.constant dense<0.000000e+00> : vector<16xf32>
    %43 = vector.multi_reduction <add>, %42, %cst_20 [1] : vector<16x256xf32> to vector<16xf32>
    %44 = vector.shape_cast %43 : vector<16xf32> to vector<16x1xf32>
    %cst_21 = arith.constant 3.906250e-03 : f32
    %45 = vector.broadcast %cst_21 : f32 to vector<16x1xf32>
    %46 = arith.mulf %44, %45 : vector<16x1xf32>
    %cst_22 = arith.constant 9.99999974E-6 : f32
    %47 = vector.broadcast %cst_22 : f32 to vector<16x1xf32>
    %48 = arith.addf %46, %47 : vector<16x1xf32>
    %49 = math.rsqrt %48 : vector<16x1xf32>
    %50 = vector.broadcast %49 : vector<16x1xf32> to vector<16x256xf32>
    %51 = arith.mulf %41, %50 : vector<16x256xf32>
    %c1_23 = arith.constant 1 : index
    %c0_24 = arith.constant 0 : index
    %52 = vector.load %arg6[%c1_23, %c0_24] : memref<3x256xf32, #tpu.memory_space<vmem>>, vector<1x256xf32>
    %53 = vector.broadcast %52 : vector<1x256xf32> to vector<16x256xf32>
    %54 = arith.mulf %51, %53 : vector<16x256xf32>
    %c2_25 = arith.constant 2 : index
    %c0_26 = arith.constant 0 : index
    %55 = vector.load %arg6[%c2_25, %c0_26] : memref<3x256xf32, #tpu.memory_space<vmem>>, vector<1x256xf32>
    %56 = vector.broadcast %55 : vector<1x256xf32> to vector<16x256xf32>
    %57 = arith.addf %54, %56 : vector<16x256xf32>
    %cst_27 = arith.constant 0.000000e+00 : f32
    %58 = vector.broadcast %cst_27 : f32 to vector<16x256xf32>
    %59 = arith.maximumf %57, %58 : vector<16x256xf32>
    %60 = arith.truncf %59 : vector<16x256xf32> to vector<16x256xbf16>
    %c0_28 = arith.constant 0 : index
    %c0_29 = arith.constant 0 : index
    %61 = vector.load %arg7[%c0_28, %c0_29] : memref<256x128xbf16, #tpu.memory_space<vmem>>, vector<256x128xbf16>
    %cst_30 = arith.constant dense<0.000000e+00> : vector<16x128xf32>
    %62 = tpu.matmul %60, %61, %cst_30 {dimension_numbers = #tpu.dot_dimension_numbers<[1], [0], [0], [1], [0, 0, 1, 1], [], []>} : vector<16x256xbf16>, vector<256x128xbf16>, vector<16x128xf32> -> vector<16x128xf32>
    %c0_31 = arith.constant 0 : index
    %c0_32 = arith.constant 0 : index
    %63 = vector.load %arg8[%c0_31, %c0_32] : memref<1x128xf32, #tpu.memory_space<vmem>>, vector<1x128xf32>
    %64 = vector.broadcast %63 : vector<1x128xf32> to vector<16x128xf32>
    %65 = arith.addf %62, %64 : vector<16x128xf32>
    %c0_33 = arith.constant 0 : index
    %c0_34 = arith.constant 0 : index
    %66 = vector.load %arg9[%c0_33, %c0_34] : memref<16x128xf32, #tpu.memory_space<vmem>>, vector<16x128xf32>
    tpu.vector_store %arg9[%c0_33, %c0_34], %65 {strides = array<i32>} : memref<16x128xf32, #tpu.memory_space<vmem>>, vector<16x128xf32>,
    %67 = vector.extract_strided_slice %65 {offsets = [0, 0], sizes = [16, 16], strides = [1, 1]} : vector<16x128xf32> to vector<16x16xf32>
    %68 = math.tanh %67 : vector<16x16xf32>
    %c0_35 = arith.constant 0 : index
    %c0_36 = arith.constant 0 : index
    %69 = vector.load %arg2[%c0_35, %c0_36] : memref<16x16xf32, #tpu.memory_space<vmem>>, vector<16x16xf32>
    %70 = arith.addf %68, %69 : vector<16x16xf32>
    %c0_37 = arith.constant 0 : index
    %c0_38 = arith.constant 0 : index
    %71 = vector.load %arg9[%c0_37, %c0_38] : memref<16x128xf32, #tpu.memory_space<vmem>>, vector<16x16xf32>
    tpu.vector_store %arg9[%c0_37, %c0_38], %70 {strides = array<i32>} : memref<16x128xf32, #tpu.memory_space<vmem>>, vector<16x16xf32>,
    return
  }
  func.func @transform_0(%arg0: i32) -> (i32, i32) {
    %c0_i32 = arith.constant 0 : i32
    %c0_i32_0 = arith.constant 0 : i32
    return %arg0, %c0_i32 : i32, i32
  }
  func.func @transform_1(%arg0: i32) -> (i32, i32) {
    %c0_i32 = arith.constant 0 : i32
    %c0_i32_0 = arith.constant 0 : i32
    return %arg0, %c0_i32 : i32, i32
  }
  func.func @transform_2(%arg0: i32) -> (i32, i32) {
    %c0_i32 = arith.constant 0 : i32
    %c0_i32_0 = arith.constant 0 : i32
    %c0_i32_1 = arith.constant 0 : i32
    return %c0_i32, %c0_i32_0 : i32, i32
  }
  func.func @transform_3(%arg0: i32) -> (i32, i32) {
    %c0_i32 = arith.constant 0 : i32
    %c0_i32_0 = arith.constant 0 : i32
    %c0_i32_1 = arith.constant 0 : i32
    return %c0_i32, %c0_i32_0 : i32, i32
  }
  func.func @transform_4(%arg0: i32) -> (i32, i32) {
    %c0_i32 = arith.constant 0 : i32
    %c0_i32_0 = arith.constant 0 : i32
    %c0_i32_1 = arith.constant 0 : i32
    return %c0_i32, %c0_i32_0 : i32, i32
  }
  func.func @transform_5(%arg0: i32) -> (i32, i32) {
    %c0_i32 = arith.constant 0 : i32
    %c0_i32_0 = arith.constant 0 : i32
    %c0_i32_1 = arith.constant 0 : i32
    return %c0_i32, %c0_i32_0 : i32, i32
  }
  func.func @transform_6(%arg0: i32) -> (i32, i32) {
    %c0_i32 = arith.constant 0 : i32
    %c0_i32_0 = arith.constant 0 : i32
    %c0_i32_1 = arith.constant 0 : i32
    return %c0_i32, %c0_i32_0 : i32, i32
  }
  func.func @transform_7(%arg0: i32) -> (i32, i32) {
    %c0_i32 = arith.constant 0 : i32
    %c0_i32_0 = arith.constant 0 : i32
    %c0_i32_1 = arith.constant 0 : i32
    return %c0_i32, %c0_i32_0 : i32, i32
  }
  func.func @transform_8(%arg0: i32) -> (i32, i32) {
    %c0_i32 = arith.constant 0 : i32
    %c0_i32_0 = arith.constant 0 : i32
    return %arg0, %c0_i32 : i32, i32
  }
}

</mosaic_0001>

<llo_original>
// kernel: fc_gaussian_actor_value_forward.1
$region0: #{fc_gaussian_actor_value_forward.1}
  #allocation0 [shape = 'u32[]', space=smem, size = 0x4, offset = 0x4, fixed_abs, tag = 'smem constant byte address 0x4 - core index']
  #allocation1 [shape = 'u32[144,128]{1,0:T(1,128)}', space=vmem, size = 0x12000, scoped, tag = 'internal scratch']
  %s0 = inlined_call_operand.vmem [shape: bf16[16,16], index: 0, kind: input, shape index: {}]
  %s1 = inlined_call_operand.vmem [shape: f32[16,16], index: 1, kind: input, shape index: {}]
  %s2 = inlined_call_operand.vmem [shape: bf16[16,256], index: 2, kind: input, shape index: {}]
  %s3 = inlined_call_operand.vmem [shape: f32[3,256], index: 3, kind: input, shape index: {}]
  %s4 = inlined_call_operand.vmem [shape: bf16[256,256], index: 4, kind: input, shape index: {}]
  %s5 = inlined_call_operand.vmem [shape: f32[3,256], index: 5, kind: input, shape index: {}]
  %s6 = inlined_call_operand.vmem [shape: bf16[256,128], index: 6, kind: input, shape index: {}]
  %s7 = inlined_call_operand.vmem [shape: f32[1,128], index: 7, kind: input, shape index: {}]
  %s8 = inlined_call_operand.vmem [shape: f32[16,128], index: 8, kind: output, shape index: {}]
  %s9 = sld [smem:[#allocation0]]
  $region42: #{fc_gaussian_actor_value_forward.1} parent=0
    _
  %s11 = ssub.s32 1, %s9
  %s12 = scalar_select 0, %s11, %s9
  // Predicated region
  $region2: #{fc_gaussian_actor_value_forward.1} parent=0 // pred_check
    _
  $region3: #{fc_gaussian_actor_value_forward.1} parent=0 // pred_check_branch
    %14 = sbr.rel (0) target = $region5
  $region4: #{fc_gaussian_actor_value_forward.1} parent=0 // pred_region
    _
  $region5: #{fc_gaussian_actor_value_forward.1} parent=0 // pred_fallthru
    _
  // Predicated region
  $region6: #{fc_gaussian_actor_value_forward.1} parent=0 // pred_check
    _
  $region7: #{fc_gaussian_actor_value_forward.1} parent=0 // pred_check_branch
    %16 = sbr.rel (0) target = $region9
  $region8: #{fc_gaussian_actor_value_forward.1} parent=0 // pred_region
    _
  $region9: #{fc_gaussian_actor_value_forward.1} parent=0 // pred_fallthru
    _
  // Predicated region
  $region10: #{fc_gaussian_actor_value_forward.1} parent=0 // pred_check
    _
  $region11: #{fc_gaussian_actor_value_forward.1} parent=0 // pred_check_branch
    %18 = sbr.rel (0) target = $region13
  $region12: #{fc_gaussian_actor_value_forward.1} parent=0 // pred_region
    _
  $region13: #{fc_gaussian_actor_value_forward.1} parent=0 // pred_fallthru
    _
  // Predicated region
  $region14: #{fc_gaussian_actor_value_forward.1} parent=0 // pred_check
    _
  $region15: #{fc_gaussian_actor_value_forward.1} parent=0 // pred_check_branch
    %20 = sbr.rel (0) target = $region17
  $region16: #{fc_gaussian_actor_value_forward.1} parent=0 // pred_region
    _
  $region17: #{fc_gaussian_actor_value_forward.1} parent=0 // pred_fallthru
    _
  // Predicated region
  $region18: #{fc_gaussian_actor_value_forward.1} parent=0 // pred_check
    _
  $region19: #{fc_gaussian_actor_value_forward.1} parent=0 // pred_check_branch
    %22 = sbr.rel (0) target = $region21
  $region20: #{fc_gaussian_actor_value_forward.1} parent=0 // pred_region
    _
  $region21: #{fc_gaussian_actor_value_forward.1} parent=0 // pred_fallthru
    _
  // Predicated region
  $region22: #{fc_gaussian_actor_value_forward.1} parent=0 // pred_check
    _
  $region23: #{fc_gaussian_actor_value_forward.1} parent=0 // pred_check_branch
    %24 = sbr.rel (0) target = $region25
  $region24: #{fc_gaussian_actor_value_forward.1} parent=0 // pred_region
    _
  $region25: #{fc_gaussian_actor_value_forward.1} parent=0 // pred_fallthru
    _
  // Predicated region
  $region26: #{fc_gaussian_actor_value_forward.1} parent=0 // pred_check
    _
  $region27: #{fc_gaussian_actor_value_forward.1} parent=0 // pred_check_branch
    %26 = sbr.rel (0) target = $region29
  $region28: #{fc_gaussian_actor_value_forward.1} parent=0 // pred_region
    _
  $region29: #{fc_gaussian_actor_value_forward.1} parent=0 // pred_fallthru
    _
  // Predicated region
  $region30: #{fc_gaussian_actor_value_forward.1} parent=0 // pred_check
    _
  $region31: #{fc_gaussian_actor_value_forward.1} parent=0 // pred_check_branch
    %28 = sbr.rel (0) target = $region33
  $region32: #{fc_gaussian_actor_value_forward.1} parent=0 // pred_region
    _
  $region33: #{fc_gaussian_actor_value_forward.1} parent=0 // pred_fallthru
    _
  %v30 = vld [vmem:[%s0] sm:$0xf]
  %v31 = vld [vmem:[%s0 + $0x4] sm:$0xf]
  %v32 = vld [vmem:[%s2] sm:$0xff]
  %v33 = vld [vmem:[%s2 + $0x8] sm:$0xff]
  %v34 = vld [vmem:[%s3] ss:$4 sm:$0x3]
  %v36 = vlaneseq
  %v37 = vshrl.u32 %v36, 7
  %v38 = vsub.s32 0, %v37
  %v39 = vrot.slane %v34, %v38
  %v40 = vlaneseq
  %v41 = vshrl.u32 %v40, 7
  %v42 = vsub.s32 1, %v41
  %v43 = vrot.slane %v34, %v42
  %v48 = vunpack.c.l.b16 %v30
  %v49 = vunpack.c.l.b16 %v31
  %v50 = vpack.c.b16 %v49, %v48
  %v53 = vunpack.c.l.b16 %v32
  %v54 = vunpack.c.h.b16 %v32
  %v55 = vunpack.c.l.b16 %v33
  %v56 = vunpack.c.h.b16 %v33
  %v57 = vpack.c.b16 %v55, %v53
  %v58 = vpack.c.b16 %v56, %v54
  %vm61 = vcmask 130048
  %v63 = vsel %vm61, %v50, 0
  %65 = vmatprep.subr.bf16.mxu0 0
  %66 = vmatpush1.bf16.msra.mxu0 0
  %67 = vmatprep.subr.bf16.mxu0 0
  %68 = vmatpush1.bf16.msra.mxu0 0
  %69 = vmatprep.subr.bf16.mxu0 0
  %70 = vmatpush1.bf16.msra.mxu0 0
  %71 = vmatprep.subr.bf16.mxu0 0
  %72 = vmatpush1.bf16.msra.mxu0 0
  %73 = vmatprep.subr.bf16.mxu0 0
  %74 = vmatpush1.bf16.msra.mxu0 0
  %75 = vmatprep.subr.bf16.mxu0 0
  %76 = vmatpush1.bf16.msra.mxu0 0
  %77 = vmatprep.subr.bf16.mxu0 0
  %78 = vmatpush1.bf16.msra.mxu0 0
  %79 = vmatprep.subr.bf16.mxu0 %v58
  %80 = vmatpush1.bf16.msra.mxu0 %v57
  %81 = vmatprep.subr.bf16.mxu0 0
  %82 = vmatpush2.bf16.msra.mxu0 0
  %83 = vmatprep.subr.bf16.mxu0 0
  %84 = vmatpush2.bf16.msra.mxu0 0
  %85 = vmatprep.subr.bf16.mxu0 0
  %86 = vmatpush2.bf16.msra.mxu0 0
  %87 = vmatprep.subr.bf16.mxu0 0
  %88 = vmatpush2.bf16.msra.mxu0 0
  %89 = vmatprep.subr.bf16.mxu0 0
  %90 = vmatpush2.bf16.msra.mxu0 0
  %91 = vmatprep.subr.bf16.mxu0 0
  %92 = vmatpush2.bf16.msra.mxu0 0
  %93 = vmatprep.subr.bf16.mxu0 0
  %94 = vmatpush2.bf16.msra.mxu0 0
  %95 = vmatprep.subr.bf16.mxu0 0
  %96 = vmatpush2.bf16.msra.mxu0 0
  %97 = vmatprep.mubr.bf16.mxu0 0
  %98 = vmatmul.mubr.bf16.gmra.mxu0 %v63
  %v99 = vpop.f32.mrf.mxu0
  %v100 = vadd.f32 %v39, %v99
  %v101 = vpop.f32.mrf.mxu0
  %v102 = vadd.f32 %v43, %v101
  %v103 = vpop.f32.mrf.mxu0
  %v104 = vadd.f32 %v39, %v103
  %v105 = vpop.f32.mrf.mxu0
  %v106 = vadd.f32 %v43, %v105
  %107 = vdwg.mxu0
  %v108 = vadd.f32 %v100, %v102
  %109 = vadd.xlane.f32.xlu0 %v108
  %v110 = vpop.xlane.xlu0 %109
  %v111 = vadd.f32 %v104, %v106
  %112 = vadd.xlane.f32.xlu0 %v111
  %v113 = vpop.xlane.xlu0 %112
  %v114 = vmul.f32 %v110, 0.00390625
  %v115 = vmul.f32 %v113, 0.00390625
  %v116 = vsub.f32 %v100, %v114
  %v117 = vsub.f32 %v102, %v114
  %v118 = vsub.f32 %v104, %v115
  %v119 = vsub.f32 %v106, %v115
  %v120 = vmul.f32 %v116, %v116
  %v121 = vmul.f32 %v117, %v117
  %v122 = vmul.f32 %v118, %v118
  %v123 = vmul.f32 %v119, %v119
  %v124 = vadd.f32 %v120, %v121
  %125 = vadd.xlane.f32.xlu0 %v124
  %v126 = vpop.xlane.xlu0 %125
  %v127 = vadd.f32 %v122, %v123
  %128 = vadd.xlane.f32.xlu0 %v127
  %v129 = vpop.xlane.xlu0 %128
  %v130 = vmul.f32 %v126, 0.00390625
  %v131 = vmul.f32 %v129, 0.00390625
  %v132 = vadd.f32 %v130, 1e-05
  %v133 = vadd.f32 %v131, 1e-05
  %v134 = vrsqrt.pop %v132
  %v135 = vrsqrt.pop %v133
  %v136 = vmul.f32 %v116, %v134
  %v137 = vmul.f32 %v117, %v134
  %v138 = vmul.f32 %v118, %v135
  %v139 = vmul.f32 %v119, %v135
  %s140 = scalar_lea.vmem %s3, 1
  %v141 = vld [vmem:[%s140] ss:$4 sm:$0x3]
  %v143 = vlaneseq
  %v144 = vshrl.u32 %v143, 7
  %v145 = vsub.s32 0, %v144
  %v146 = vrot.slane %v141, %v145
  %v147 = vlaneseq
  %v148 = vshrl.u32 %v147, 7
  %v149 = vsub.s32 1, %v148
  %v150 = vrot.slane %v141, %v149
  %v153 = vmul.f32 %v136, %v146
  %v154 = vmul.f32 %v137, %v150
  %v155 = vmul.f32 %v138, %v146
  %v156 = vmul.f32 %v139, %v150
  %s157 = scalar_lea.vmem %s3, 2
  %v158 = vld [vmem:[%s157] ss:$4 sm:$0x3]
  %v160 = vlaneseq
  %v161 = vshrl.u32 %v160, 7
  %v162 = vsub.s32 0, %v161
  %v163 = vrot.slane %v158, %v162
  %v164 = vlaneseq
  %v165 = vshrl.u32 %v164, 7
  %v166 = vsub.s32 1, %v165
  %v167 = vrot.slane %v158, %v166
  %v170 = vadd.f32 %v153, %v163
  %v171 = vadd.f32 %v154, %v167
  %v172 = vadd.f32 %v155, %v163
  %v173 = vadd.f32 %v156, %v167
  %v174 = vmax.f32 %v170, 0.0
  %v175 = vmax.f32 %v171, 0.0
  %v176 = vmax.f32 %v172, 0.0
  %v177 = vmax.f32 %v173, 0.0
  %v178 = vpack.c.bf16 %v176, %v174
  %v179 = vpack.c.bf16 %v177, %v175
  %v180 = vld [vmem:[%s4] sm:$0xff]
  %v181 = vld [vmem:[%s4 + $0x8] sm:$0xff]
  %v182 = vld [vmem:[%s4 + $0x10] sm:$0xff]
  %v183 = vld [vmem:[%s4 + $0x18] sm:$0xff]
  %v184 = vld [vmem:[%s4 + $0x20] sm:$0xff]
  %v185 = vld [vmem:[%s4 + $0x28] sm:$0xff]
  %v186 = vld [vmem:[%s4 + $0x30] sm:$0xff]
  %v187 = vld [vmem:[%s4 + $0x38] sm:$0xff]
  %v188 = vld [vmem:[%s4 + $0x40] sm:$0xff]
  %v189 = vld [vmem:[%s4 + $0x48] sm:$0xff]
  %v190 = vld [vmem:[%s4 + $0x50] sm:$0xff]
  %v191 = vld [vmem:[%s4 + $0x58] sm:$0xff]
  %v192 = vld [vmem:[%s4 + $0x60] sm:$0xff]
  %v193 = vld [vmem:[%s4 + $0x68] sm:$0xff]
  %v194 = vld [vmem:[%s4 + $0x70] sm:$0xff]
  %v195 = vld [vmem:[%s4 + $0x78] sm:$0xff]
  %v196 = vld [vmem:[%s4 + $0x80] sm:$0xff]
  %v197 = vld [vmem:[%s4 + $0x88] sm:$0xff]
  %v198 = vld [vmem:[%s4 + $0x90] sm:$0xff]
  %v199 = vld [vmem:[%s4 + $0x98] sm:$0xff]
  %v200 = vld [vmem:[%s4 + $0xa0] sm:$0xff]
  %v201 = vld [vmem:[%s4 + $0xa8] sm:$0xff]
  %v202 = vld [vmem:[%s4 + $0xb0] sm:$0xff]
  %v203 = vld [vmem:[%s4 + $0xb8] sm:$0xff]
  %v204 = vld [vmem:[%s4 + $0xc0] sm:$0xff]
  %v205 = vld [vmem:[%s4 + $0xc8] sm:$0xff]
  %v206 = vld [vmem:[%s4 + $0xd0] sm:$0xff]
  %v207 = vld [vmem:[%s4 + $0xd8] sm:$0xff]
  %v208 = vld [vmem:[%s4 + $0xe0] sm:$0xff]
  %v209 = vld [vmem:[%s4 + $0xe8] sm:$0xff]
  %v210 = vld [vmem:[%s4 + $0xf0] sm:$0xff]
  %v211 = vld [vmem:[%s4 + $0xf8] sm:$0xff]
  %v212 = vld [vmem:[%s5] ss:$4 sm:$0x3]
  %v214 = vlaneseq
  %v215 = vshrl.u32 %v214, 7
  %v216 = vsub.s32 0, %v215
  %v217 = vrot.slane %v212, %v216
  %v218 = vlaneseq
  %v219 = vshrl.u32 %v218, 7
  %v220 = vsub.s32 1, %v219
  %v221 = vrot.slane %v212, %v220
  %v256 = vunpack.c.l.b16 %v180
  %v257 = vunpack.c.h.b16 %v180
  %v258 = vunpack.c.l.b16 %v181
  %v259 = vunpack.c.h.b16 %v181
  %v260 = vunpack.c.l.b16 %v182
  %v261 = vunpack.c.h.b16 %v182
  %v262 = vunpack.c.l.b16 %v183
  %v263 = vunpack.c.h.b16 %v183
  %v264 = vunpack.c.l.b16 %v184
  %v265 = vunpack.c.h.b16 %v184
  %v266 = vunpack.c.l.b16 %v185
  %v267 = vunpack.c.h.b16 %v185
  %v268 = vunpack.c.l.b16 %v186
  %v269 = vunpack.c.h.b16 %v186
  %v270 = vunpack.c.l.b16 %v187
  %v271 = vunpack.c.h.b16 %v187
  %v272 = vunpack.c.l.b16 %v188
  %v273 = vunpack.c.h.b16 %v188
  %v274 = vunpack.c.l.b16 %v189
  %v275 = vunpack.c.h.b16 %v189
  %v276 = vunpack.c.l.b16 %v190
  %v277 = vunpack.c.h.b16 %v190
  %v278 = vunpack.c.l.b16 %v191
  %v279 = vunpack.c.h.b16 %v191
  %v280 = vunpack.c.l.b16 %v192
  %v281 = vunpack.c.h.b16 %v192
  %v282 = vunpack.c.l.b16 %v193
  %v283 = vunpack.c.h.b16 %v193
  %v284 = vunpack.c.l.b16 %v194
  %v285 = vunpack.c.h.b16 %v194
  %v286 = vunpack.c.l.b16 %v195
  %v287 = vunpack.c.h.b16 %v195
  %v288 = vunpack.c.l.b16 %v196
  %v289 = vunpack.c.h.b16 %v196
  %v290 = vunpack.c.l.b16 %v197
  %v291 = vunpack.c.h.b16 %v197
  %v292 = vunpack.c.l.b16 %v198
  %v293 = vunpack.c.h.b16 %v198
  %v294 = vunpack.c.l.b16 %v199
  %v295 = vunpack.c.h.b16 %v199
  %v296 = vunpack.c.l.b16 %v200
  %v297 = vunpack.c.h.b16 %v200
  %v298 = vunpack.c.l.b16 %v201
  %v299 = vunpack.c.h.b16 %v201
  %v300 = vunpack.c.l.b16 %v202
  %v301 = vunpack.c.h.b16 %v202
  %v302 = vunpack.c.l.b16 %v203
  %v303 = vunpack.c.h.b16 %v203
  %v304 = vunpack.c.l.b16 %v204
  %v305 = vunpack.c.h.b16 %v204
  %v306 = vunpack.c.l.b16 %v205
  %v307 = vunpack.c.h.b16 %v205
  %v308 = vunpack.c.l.b16 %v206
  %v309 = vunpack.c.h.b16 %v206
  %v310 = vunpack.c.l.b16 %v207
  %v311 = vunpack.c.h.b16 %v207
  %v312 = vunpack.c.l.b16 %v208
  %v313 = vunpack.c.h.b16 %v208
  %v314 = vunpack.c.l.b16 %v209
  %v315 = vunpack.c.h.b16 %v209
  %v316 = vunpack.c.l.b16 %v210
  %v317 = vunpack.c.h.b16 %v210
  %v318 = vunpack.c.l.b16 %v211
  %v319 = vunpack.c.h.b16 %v211
  %v320 = vpack.c.b16 %v258, %v256
  %v321 = vpack.c.b16 %v259, %v257
  %v322 = vpack.c.b16 %v262, %v260
  %v323 = vpack.c.b16 %v263, %v261
  %v324 = vpack.c.b16 %v266, %v264
  %v325 = vpack.c.b16 %v267, %v265
  %v326 = vpack.c.b16 %v270, %v268
  %v327 = vpack.c.b16 %v271, %v269
  %v328 = vpack.c.b16 %v274, %v272
  %v329 = vpack.c.b16 %v275, %v273
  %v330 = vpack.c.b16 %v278, %v276
  %v331 = vpack.c.b16 %v279, %v277
  %v332 = vpack.c.b16 %v282, %v280
  %v333 = vpack.c.b16 %v283, %v281
  %v334 = vpack.c.b16 %v286, %v284
  %v335 = vpack.c.b16 %v287, %v285
  %v336 = vpack.c.b16 %v290, %v288
  %v337 = vpack.c.b16 %v291, %v289
  %v338 = vpack.c.b16 %v294, %v292
  %v339 = vpack.c.b16 %v295, %v293
  %v340 = vpack.c.b16 %v298, %v296
  %v341 = vpack.c.b16 %v299, %v297
  %v342 = vpack.c.b16 %v302, %v300
  %v343 = vpack.c.b16 %v303, %v301
  %v344 = vpack.c.b16 %v306, %v304
  %v345 = vpack.c.b16 %v307, %v305
  %v346 = vpack.c.b16 %v310, %v308
  %v347 = vpack.c.b16 %v311, %v309
  %v348 = vpack.c.b16 %v314, %v312
  %v349 = vpack.c.b16 %v315, %v313
  %v350 = vpack.c.b16 %v318, %v316
  %v351 = vpack.c.b16 %v319, %v317
  %384 = vmatprep.subr.bf16.mxu0 %v335
  %385 = vmatpush1.bf16.msra.mxu0 %v334
  %386 = vmatprep.subr.bf16.mxu0 %v333
  %387 = vmatpush1.bf16.msra.mxu0 %v332
  %388 = vmatprep.subr.bf16.mxu0 %v331
  %389 = vmatpush1.bf16.msra.mxu0 %v330
  %390 = vmatprep.subr.bf16.mxu0 %v329
  %391 = vmatpush1.bf16.msra.mxu0 %v328
  %392 = vmatprep.subr.bf16.mxu0 %v327
  %393 = vmatpush1.bf16.msra.mxu0 %v326
  %394 = vmatprep.subr.bf16.mxu0 %v325
  %395 = vmatpush1.bf16.msra.mxu0 %v324
  %396 = vmatprep.subr.bf16.mxu0 %v323
  %397 = vmatpush1.bf16.msra.mxu0 %v322
  %398 = vmatprep.subr.bf16.mxu0 %v321
  %399 = vmatpush1.bf16.msra.mxu0 %v320
  %400 = vmatprep.subr.bf16.mxu0 %v351
  %401 = vmatpush2.bf16.msra.mxu0 %v350
  %402 = vmatprep.subr.bf16.mxu0 %v349
  %403 = vmatpush2.bf16.msra.mxu0 %v348
  %404 = vmatprep.subr.bf16.mxu0 %v347
  %405 = vmatpush2.bf16.msra.mxu0 %v346
  %406 = vmatprep.subr.bf16.mxu0 %v345
  %407 = vmatpush2.bf16.msra.mxu0 %v344
  %408 = vmatprep.subr.bf16.mxu0 %v343
  %409 = vmatpush2.bf16.msra.mxu0 %v342
  %410 = vmatprep.subr.bf16.mxu0 %v341
  %411 = vmatpush2.bf16.msra.mxu0 %v340
  %412 = vmatprep.subr.bf16.mxu0 %v339
  %413 = vmatpush2.bf16.msra.mxu0 %v338
  %414 = vmatprep.subr.bf16.mxu0 %v337
  %415 = vmatpush2.bf16.msra.mxu0 %v336
  %416 = vmatprep.mubr.bf16.mxu0 %v179
  %417 = vmatmul.mubr.bf16.gmra.mxu0 %v178
  %v418 = vpop.f32.mrf.mxu0
  %v419 = vadd.f32 %v217, %v418
  %v420 = vpop.f32.mrf.mxu0
  %v421 = vadd.f32 %v221, %v420
  %v422 = vpop.f32.mrf.mxu0
  %v423 = vadd.f32 %v217, %v422
  %v424 = vpop.f32.mrf.mxu0
  %v425 = vadd.f32 %v221, %v424
  %426 = vdwg.mxu0
  %v427 = vadd.f32 %v419, %v421
  %428 = vadd.xlane.f32.xlu0 %v427
  %v429 = vpop.xlane.xlu0 %428
  %v430 = vadd.f32 %v423, %v425
  %431 = vadd.xlane.f32.xlu0 %v430
  %v432 = vpop.xlane.xlu0 %431
  %v433 = vmul.f32 %v429, 0.00390625
  %v434 = vmul.f32 %v432, 0.00390625
  %v435 = vsub.f32 %v419, %v433
  %v436 = vsub.f32 %v421, %v433
  %v437 = vsub.f32 %v423, %v434
  %v438 = vsub.f32 %v425, %v434
  %v439 = vmul.f32 %v435, %v435
  %v440 = vmul.f32 %v436, %v436
  %v441 = vmul.f32 %v437, %v437
  %v442 = vmul.f32 %v438, %v438
  %v443 = vadd.f32 %v439, %v440
  %444 = vadd.xlane.f32.xlu0 %v443
  %v445 = vpop.xlane.xlu0 %444
  %v446 = vadd.f32 %v441, %v442
  %447 = vadd.xlane.f32.xlu0 %v446
  %v448 = vpop.xlane.xlu0 %447
  %v449 = vmul.f32 %v445, 0.00390625
  %v450 = vmul.f32 %v448, 0.00390625
  %v451 = vadd.f32 %v449, 1e-05
  %v452 = vadd.f32 %v450, 1e-05
  %v453 = vrsqrt.pop %v451
  %v454 = vrsqrt.pop %v452
  %v455 = vmul.f32 %v435, %v453
  %v456 = vmul.f32 %v436, %v453
  %v457 = vmul.f32 %v437, %v454
  %v458 = vmul.f32 %v438, %v454
  %s459 = scalar_lea.vmem %s5, 1
  %v460 = vld [vmem:[%s459] ss:$4 sm:$0x3]
  %v462 = vlaneseq
  %v463 = vshrl.u32 %v462, 7
  %v464 = vsub.s32 0, %v463
  %v465 = vrot.slane %v460, %v464
  %v466 = vlaneseq
  %v467 = vshrl.u32 %v466, 7
  %v468 = vsub.s32 1, %v467
  %v469 = vrot.slane %v460, %v468
  %v472 = vmul.f32 %v455, %v465
  %v473 = vmul.f32 %v456, %v469
  %v474 = vmul.f32 %v457, %v465
  %v475 = vmul.f32 %v458, %v469
  %s476 = scalar_lea.vmem %s5, 2
  %v477 = vld [vmem:[%s476] ss:$4 sm:$0x3]
  %v479 = vlaneseq
  %v480 = vshrl.u32 %v479, 7
  %v481 = vsub.s32 0, %v480
  %v482 = vrot.slane %v477, %v481
  %v483 = vlaneseq
  %v484 = vshrl.u32 %v483, 7
  %v485 = vsub.s32 1, %v484
  %v486 = vrot.slane %v477, %v485
  %v489 = vadd.f32 %v472, %v482
  %v490 = vadd.f32 %v473, %v486
  %v491 = vadd.f32 %v474, %v482
  %v492 = vadd.f32 %v475, %v486
  %v493 = vmax.f32 %v489, 0.0
  %v494 = vmax.f32 %v490, 0.0
  %v495 = vmax.f32 %v491, 0.0
  %v496 = vmax.f32 %v492, 0.0
  %v497 = vpack.c.bf16 %v495, %v493
  %v498 = vpack.c.bf16 %v496, %v494
  %v499 = vld [vmem:[%s6] sm:$0xf]
  %v500 = vld [vmem:[%s6 + $0x4] sm:$0xf]
  %v501 = vld [vmem:[%s6 + $0x8] sm:$0xf]
  %v502 = vld [vmem:[%s6 + $0xc] sm:$0xf]
  %v503 = vld [vmem:[%s6 + $0x10] sm:$0xf]
  %v504 = vld [vmem:[%s6 + $0x14] sm:$0xf]
  %v505 = vld [vmem:[%s6 + $0x18] sm:$0xf]
  %v506 = vld [vmem:[%s6 + $0x1c] sm:$0xf]
  %v507 = vld [vmem:[%s6 + $0x20] sm:$0xf]
  %v508 = vld [vmem:[%s6 + $0x24] sm:$0xf]
  %v509 = vld [vmem:[%s6 + $0x28] sm:$0xf]
  %v510 = vld [vmem:[%s6 + $0x2c] sm:$0xf]
  %v511 = vld [vmem:[%s6 + $0x30] sm:$0xf]
  %v512 = vld [vmem:[%s6 + $0x34] sm:$0xf]
  %v513 = vld [vmem:[%s6 + $0x38] sm:$0xf]
  %v514 = vld [vmem:[%s6 + $0x3c] sm:$0xf]
  %v515 = vld [vmem:[%s6 + $0x40] sm:$0xf]
  %v516 = vld [vmem:[%s6 + $0x44] sm:$0xf]
  %v517 = vld [vmem:[%s6 + $0x48] sm:$0xf]
  %v518 = vld [vmem:[%s6 + $0x4c] sm:$0xf]
  %v519 = vld [vmem:[%s6 + $0x50] sm:$0xf]
  %v520 = vld [vmem:[%s6 + $0x54] sm:$0xf]
  %v521 = vld [vmem:[%s6 + $0x58] sm:$0xf]
  %v522 = vld [vmem:[%s6 + $0x5c] sm:$0xf]
  %v523 = vld [vmem:[%s6 + $0x60] sm:$0xf]
  %v524 = vld [vmem:[%s6 + $0x64] sm:$0xf]
  %v525 = vld [vmem:[%s6 + $0x68] sm:$0xf]
  %v526 = vld [vmem:[%s6 + $0x6c] sm:$0xf]
  %v527 = vld [vmem:[%s6 + $0x70] sm:$0xf]
  %v528 = vld [vmem:[%s6 + $0x74] sm:$0xf]
  %v529 = vld [vmem:[%s6 + $0x78] sm:$0xf]
  %v530 = vld [vmem:[%s6 + $0x7c] sm:$0xf]
  %v531 = vld [vmem:[%s7] sm:$0x1]
  %v533 = vlaneseq
  %v534 = vshrl.u32 %v533, 7
  %v535 = vsub.s32 0, %v534
  %v536 = vrot.slane %v531, %v535
  %v570 = vunpack.c.l.b16 %v499
  %v571 = vunpack.c.l.b16 %v500
  %v572 = vunpack.c.l.b16 %v501
  %v573 = vunpack.c.l.b16 %v502
  %v574 = vunpack.c.l.b16 %v503
  %v575 = vunpack.c.l.b16 %v504
  %v576 = vunpack.c.l.b16 %v505
  %v577 = vunpack.c.l.b16 %v506
  %v578 = vunpack.c.l.b16 %v507
  %v579 = vunpack.c.l.b16 %v508
  %v580 = vunpack.c.l.b16 %v509
  %v581 = vunpack.c.l.b16 %v510
  %v582 = vunpack.c.l.b16 %v511
  %v583 = vunpack.c.l.b16 %v512
  %v584 = vunpack.c.l.b16 %v513
  %v585 = vunpack.c.l.b16 %v514
  %v586 = vunpack.c.l.b16 %v515
  %v587 = vunpack.c.l.b16 %v516
  %v588 = vunpack.c.l.b16 %v517
  %v589 = vunpack.c.l.b16 %v518
  %v590 = vunpack.c.l.b16 %v519
  %v591 = vunpack.c.l.b16 %v520
  %v592 = vunpack.c.l.b16 %v521
  %v593 = vunpack.c.l.b16 %v522
  %v594 = vunpack.c.l.b16 %v523
  %v595 = vunpack.c.l.b16 %v524
  %v596 = vunpack.c.l.b16 %v525
  %v597 = vunpack.c.l.b16 %v526
  %v598 = vunpack.c.l.b16 %v527
  %v599 = vunpack.c.l.b16 %v528
  %v600 = vunpack.c.l.b16 %v529
  %v601 = vunpack.c.l.b16 %v530
  %v602 = vpack.c.b16 %v571, %v570
  %v603 = vpack.c.b16 %v573, %v572
  %v604 = vpack.c.b16 %v575, %v574
  %v605 = vpack.c.b16 %v577, %v576
  %v606 = vpack.c.b16 %v579, %v578
  %v607 = vpack.c.b16 %v581, %v580
  %v608 = vpack.c.b16 %v583, %v582
  %v609 = vpack.c.b16 %v585, %v584
  %v610 = vpack.c.b16 %v587, %v586
  %v611 = vpack.c.b16 %v589, %v588
  %v612 = vpack.c.b16 %v591, %v590
  %v613 = vpack.c.b16 %v593, %v592
  %v614 = vpack.c.b16 %v595, %v594
  %v615 = vpack.c.b16 %v597, %v596
  %v616 = vpack.c.b16 %v599, %v598
  %v617 = vpack.c.b16 %v601, %v600
  %634 = vmatprep.subr.bf16.mxu0 0
  %635 = vmatpush1.bf16.msra.mxu0 %v609
  %636 = vmatprep.subr.bf16.mxu0 0
  %637 = vmatpush1.bf16.msra.mxu0 %v608
  %638 = vmatprep.subr.bf16.mxu0 0
  %639 = vmatpush1.bf16.msra.mxu0 %v607
  %640 = vmatprep.subr.bf16.mxu0 0
  %641 = vmatpush1.bf16.msra.mxu0 %v606
  %642 = vmatprep.subr.bf16.mxu0 0
  %643 = vmatpush1.bf16.msra.mxu0 %v605
  %644 = vmatprep.subr.bf16.mxu0 0
  %645 = vmatpush1.bf16.msra.mxu0 %v604
  %646 = vmatprep.subr.bf16.mxu0 0
  %647 = vmatpush1.bf16.msra.mxu0 %v603
  %648 = vmatprep.subr.bf16.mxu0 0
  %649 = vmatpush1.bf16.msra.mxu0 %v602
  %650 = vmatprep.subr.bf16.mxu0 0
  %651 = vmatpush2.bf16.msra.mxu0 %v617
  %652 = vmatprep.subr.bf16.mxu0 0
  %653 = vmatpush2.bf16.msra.mxu0 %v616
  %654 = vmatprep.subr.bf16.mxu0 0
  %655 = vmatpush2.bf16.msra.mxu0 %v615
  %656 = vmatprep.subr.bf16.mxu0 0
  %657 = vmatpush2.bf16.msra.mxu0 %v614
  %658 = vmatprep.subr.bf16.mxu0 0
  %659 = vmatpush2.bf16.msra.mxu0 %v613
  %660 = vmatprep.subr.bf16.mxu0 0
  %661 = vmatpush2.bf16.msra.mxu0 %v612
  %662 = vmatprep.subr.bf16.mxu0 0
  %663 = vmatpush2.bf16.msra.mxu0 %v611
  %664 = vmatprep.subr.bf16.mxu0 0
  %665 = vmatpush2.bf16.msra.mxu0 %v610
  %666 = vmatprep.mubr.bf16.mxu0 %v498
  %667 = vmatmul.mubr.bf16.gmra.mxu0 %v497
  %v668 = vpop.f32.mrf.mxu0
  %v669 = vadd.f32 %v536, %v668
  %v670 = vpop.f32.mrf.mxu0
  %v671 = vpop.f32.mrf.mxu0
  %v672 = vadd.f32 %v536, %v671
  %v673 = vpop.f32.mrf.mxu0
  %674 = vdwg.mxu0
  %675 = vst [vmem:[%s8] sm:$0xff] %v669
  %676 = vst [vmem:[%s8 + $0x8] sm:$0xff] %v672
  %v677 = vtanh.pop %v669
  %v678 = vtanh.pop %v672
  %v679 = vld [vmem:[%s1] sm:$0xff]
  %v680 = vld [vmem:[%s1 + $0x8] sm:$0xff]
  %v681 = vadd.f32 %v677, %v679
  %v682 = vadd.f32 %v678, %v680
  %683 = vst.msk [vmem:[%s8] sm:$0xff] %vm61, %v681
  %684 = vst.msk [vmem:[%s8 + $0x8] sm:$0xff] %vm61, %v682
  // Predicated region
  $region34: #{fc_gaussian_actor_value_forward.1} parent=0 // pred_check
    _
  $region35: #{fc_gaussian_actor_value_forward.1} parent=0 // pred_check_branch
    %686 = sbr.rel (0) target = $region37
  $region36: #{fc_gaussian_actor_value_forward.1} parent=0 // pred_region
    _
  $region37: #{fc_gaussian_actor_value_forward.1} parent=0 // pred_fallthru
    _
  // Predicated region
  $region38: #{fc_gaussian_actor_value_forward.1} parent=0 // pred_check
    _
  $region39: #{fc_gaussian_actor_value_forward.1} parent=0 // pred_check_branch
    %688 = sbr.rel (0) target = $region41
  $region40: #{fc_gaussian_actor_value_forward.1} parent=0 // pred_region
    _
  $region41: #{fc_gaussian_actor_value_forward.1} parent=0 // pred_fallthru
    _

</llo_original>
